<compile_context>
chip_gen: v6e
topology: v6e:2x2x1
jax: 0.10.0
libtpu: 0.0.40
codegen_flags: <defaults>
</compile_context>

<pallas_src>
import functools
import math

import jax
import jax.numpy as jnp
from jax.experimental import pallas as pl
from jax.experimental.pallas import tpu as pltpu

INF = 1.0e10


def _flash_attn_kernel(q_ref, k_ref, v_ref, o_ref, m_sc, l_sc, acc_sc,
                       *, scale, causal, tq, tk):
    qi = pl.program_id(1)
    ki = pl.program_id(2)

    @pl.when(ki == 0)
    def _init():
        m_sc[...] = jnp.full_like(m_sc, -jnp.inf)
        l_sc[...] = jnp.zeros_like(l_sc)
        acc_sc[...] = jnp.zeros_like(acc_sc)

    def _compute():
        q = q_ref[...].astype(jnp.float32)                 # (tq, D)
        k = k_ref[...].astype(jnp.float32)                 # (tk, D)
        # s = q @ k^T  on the MXU, f32 accumulation
        s = jax.lax.dot_general(q, k, (((1,), (1,)), ((), ())),
                                preferred_element_type=jnp.float32)  # (tq, tk)
        if causal:
            row = qi * tq + jax.lax.broadcasted_iota(jnp.int32, (tq, tk), 0)
            col = ki * tk + jax.lax.broadcasted_iota(jnp.int32, (tq, tk), 1)
            # Exactly mirrors torch: subtract INF on the strict upper triangle
            # of the *unscaled* dot products.
            s = s - jnp.where(col > row, jnp.float32(INF), jnp.float32(0.0))
        s = s * jnp.float32(1.0 / scale)

        m_prev = m_sc[...]                                 # (tq, 1)
        m_new = jnp.maximum(m_prev, jnp.max(s, axis=-1, keepdims=True))
        alpha = jnp.exp(m_prev - m_new)
        p = jnp.exp(s - m_new)                             # (tq, tk)
        v = v_ref[...].astype(jnp.float32)                 # (tk, Dv)

        l_sc[...] = alpha * l_sc[...] + jnp.sum(p, axis=-1, keepdims=True)
        acc_sc[...] = alpha * acc_sc[...] + jnp.dot(
            p, v, preferred_element_type=jnp.float32)
        m_sc[...] = m_new

    if causal:
        # Skip kv blocks that lie entirely in the (masked) future of this q
        # block; their contribution is exactly zero (exp underflows).
        pl.when(ki * tk <= qi * tq + (tq - 1))(_compute)
    else:
        _compute()

    @pl.when(ki == pl.num_programs(2) - 1)
    def _finalize():
        inv = pl.reciprocal(l_sc[...], approx=False)       # EUP, not a VPU divide
        o_ref[...] = (acc_sc[...] * inv).astype(o_ref.dtype)


def _pick_tile(n, max_tile):
    """Largest multiple of 8 that divides n and is <= max_tile, else n."""
    t = min(max_tile, n)
    start = t - (t % 8) if t % 8 else t
    for cand in range(start, 0, -8):
        if n % cand == 0:
            return cand
    return n  # full dimension is always a legal block size


def attention(query, key, value, *, d_key=None, causal=True, drop_ratio=0.0,
              block_q=256, block_k=256, vmem_limit_bytes=32 * 1024 * 1024):
    """query: (B, Lq, Dk), key: (B, Lk, Dk), value: (B, Lk, Dv)."""
    del drop_ratio  # dropout is identity at inference
    B, Lq, Dq = query.shape
    Bk, Lk, Dk = key.shape
    Bv, Lv, Dv = value.shape
    assert B == Bk == Bv and Dq == Dk and Lk == Lv
    if causal:
        assert Lq == Lk, "causal mask requires equal query/key lengths"
    if d_key is None:
        d_key = Dq
    scale = math.sqrt(d_key)

    tq = _pick_tile(Lq, block_q)
    tk = _pick_tile(Lk, block_k)
    grid = (B, Lq // tq, Lk // tk)

    kernel = functools.partial(_flash_attn_kernel,
                               scale=scale, causal=causal, tq=tq, tk=tk)

    return pl.pallas_call(
        kernel,
        out_shape=jax.ShapeDtypeStruct((B, Lq, Dv), query.dtype),
        grid_spec=pltpu.PrefetchScalarGridSpec(
            num_scalar_prefetch=0,
            grid=grid,
            in_specs=[
                pl.BlockSpec((None, tq, Dq), lambda b, qi, ki: (b, qi, 0)),
                pl.BlockSpec((None, tk, Dk), lambda b, qi, ki: (b, ki, 0)),
                pl.BlockSpec((None, tk, Dv), lambda b, qi, ki: (b, ki, 0)),
            ],
            out_specs=pl.BlockSpec((None, tq, Dv), lambda b, qi, ki: (b, qi, 0)),
            scratch_shapes=[
                pltpu.VMEM((tq, 1), jnp.float32),    # running max m
                pltpu.VMEM((tq, 1), jnp.float32),    # running denom l
                pltpu.VMEM((tq, Dv), jnp.float32),   # output accumulator
            ],
        ),
        compiler_params=pltpu.CompilerParams(
            dimension_semantics=("parallel", "parallel", "arbitrary"),
            vmem_limit_bytes=vmem_limit_bytes,
        ),
    )(query, key, value)


def attention_ref(query, key, value, d_key=None, causal=True):
    """Pure-JAX reference with identical (torch-matching) semantics."""
    if d_key is None:
        d_key = query.shape[-1]
    scale = math.sqrt(d_key)
    s = jnp.einsum("bqd,bkd->bqk", query, key)
    if causal:
        L = key.shape[1]
        tri = jnp.triu(jnp.ones((L, L), dtype=s.dtype), k=1) * INF
        s = s - tri[None, :, :]
    p = jax.nn.softmax(s / scale, axis=-1)
    return jnp.einsum("bqk,bkd->bqd", p, value)


if __name__ == "__main__":
    key0 = jax.random.PRNGKey(0)
    kq, kk, kv = jax.random.split(key0, 3)
    batch, seq, d_key = 2, 8, 32

    q = jax.random.normal(kq, (batch, seq, d_key), dtype=jnp.float32)
    k = jax.random.normal(kk, (batch, seq, d_key), dtype=jnp.float32)
    v = jax.random.normal(kv, (batch, seq, d_key), dtype=jnp.float32)

    # Causal (matches the module with causal=True, dropout in eval mode).
    out = jax.block_until_ready(attention(q, k, v, causal=True))
    ref = attention_ref(q, k, v, causal=True)
    assert out.shape == ref.shape
    assert jnp.allclose(out, ref, atol=1e-4, rtol=1e-4), "mismatch (causal)"

    # Non-causal path.
    out_nc = jax.block_until_ready(attention(q, k, v, causal=False))
    ref_nc = attention_ref(q, k, v, causal=False)
    assert jnp.allclose(out_nc, ref_nc, atol=1e-4, rtol=1e-4), "mismatch (non-causal)"

    print("KERNEL_OK")
</pallas_src>

<mosaic_0001>
module attributes {stable_mosaic.version = 11 : i64} {
  func.func @_flash_attn_kernel(%arg0: i32, %arg1: i32, %arg2: i32, %arg3: memref<1x8x32xf32, #tpu.memory_space<vmem>>, %arg4: memref<1x8x32xf32, #tpu.memory_space<vmem>>, %arg5: memref<1x8x32xf32, #tpu.memory_space<vmem>>, %arg6: memref<1x8x32xf32, #tpu.memory_space<vmem>>, %arg7: memref<8x1xf32, #tpu.memory_space<vmem>>, %arg8: memref<8x1xf32, #tpu.memory_space<vmem>>, %arg9: memref<8x32xf32, #tpu.memory_space<vmem>>) attributes {dimension_semantics = [#tpu.dimension_semantics<parallel>, #tpu.dimension_semantics<parallel>, #tpu.dimension_semantics<arbitrary>], iteration_bounds = array<i64: 2, 1, 1>, scalar_prefetch = 0 : i64, scratch_operands = 3 : i64, tpu.core_type = #tpu.core_type<tc>, window_params = [{transform_indices = @transform_0, window_bounds = array<i64: 1, 8, 32>}, {transform_indices = @transform_1, window_bounds = array<i64: 1, 8, 32>}, {transform_indices = @transform_2, window_bounds = array<i64: 1, 8, 32>}, {transform_indices = @transform_3, window_bounds = array<i64: 1, 8, 32>}]} {
    %c0_i32 = arith.constant 0 : i32
    %0 = arith.cmpi eq, %arg2, %c0_i32 : i32
    %1 = arith.extui %0 : i1 to i32
    %c0_i32_0 = arith.constant 0 : i32
    %2 = arith.cmpi ne, %1, %c0_i32_0 : i32
    scf.if %2 {
      %cst = arith.constant 0xFF800000 : f32
      %12 = vector.broadcast %cst : f32 to vector<8x1xf32>
      %c0 = arith.constant 0 : index
      %c0_5 = arith.constant 0 : index
      %13 = vector.load %arg7[%c0, %c0_5] : memref<8x1xf32, #tpu.memory_space<vmem>>, vector<8x1xf32>
      tpu.vector_store %arg7[%c0, %c0_5], %12 {strides = array<i32>} : memref<8x1xf32, #tpu.memory_space<vmem>>, vector<8x1xf32>,
      %cst_6 = arith.constant 0.000000e+00 : f32
      %14 = vector.broadcast %cst_6 : f32 to vector<8x1xf32>
      %c0_7 = arith.constant 0 : index
      %c0_8 = arith.constant 0 : index
      %15 = vector.load %arg8[%c0_7, %c0_8] : memref<8x1xf32, #tpu.memory_space<vmem>>, vector<8x1xf32>
      tpu.vector_store %arg8[%c0_7, %c0_8], %14 {strides = array<i32>} : memref<8x1xf32, #tpu.memory_space<vmem>>, vector<8x1xf32>,
      %cst_9 = arith.constant 0.000000e+00 : f32
      %16 = vector.broadcast %cst_9 : f32 to vector<8x32xf32>
      %c0_10 = arith.constant 0 : index
      %c0_11 = arith.constant 0 : index
      %17 = vector.load %arg9[%c0_10, %c0_11] : memref<8x32xf32, #tpu.memory_space<vmem>>, vector<8x32xf32>
      tpu.vector_store %arg9[%c0_10, %c0_11], %16 {strides = array<i32>} : memref<8x32xf32, #tpu.memory_space<vmem>>, vector<8x32xf32>,
    } else {
    }
    %c8_i32 = arith.constant 8 : i32
    %3 = arith.muli %arg2, %c8_i32 : i32
    %c8_i32_1 = arith.constant 8 : i32
    %4 = arith.muli %arg1, %c8_i32_1 : i32
    %c7_i32 = arith.constant 7 : i32
    %5 = arith.addi %4, %c7_i32 : i32
    %6 = arith.cmpi sle, %3, %5 : i32
    %7 = arith.extui %6 : i1 to i32
    %c0_i32_2 = arith.constant 0 : i32
    %8 = arith.cmpi ne, %7, %c0_i32_2 : i32
    scf.if %8 {
      %c0 = arith.constant 0 : index
      %c0_5 = arith.constant 0 : index
      %c0_6 = arith.constant 0 : index
      %12 = vector.load %arg3[%c0, %c0_5, %c0_6] : memref<1x8x32xf32, #tpu.memory_space<vmem>>, vector<1x8x32xf32>
      %13 = vector.shape_cast %12 : vector<1x8x32xf32> to vector<8x32xf32>
      %c0_7 = arith.constant 0 : index
      %c0_8 = arith.constant 0 : index
      %c0_9 = arith.constant 0 : index
      %14 = vector.load %arg4[%c0_7, %c0_8, %c0_9] : memref<1x8x32xf32, #tpu.memory_space<vmem>>, vector<1x8x32xf32>
      %15 = vector.shape_cast %14 : vector<1x8x32xf32> to vector<8x32xf32>
      %cst = arith.constant dense<0.000000e+00> : vector<8x8xf32>
      %16 = tpu.matmul %13, %15, %cst {dimension_numbers = #tpu.dot_dimension_numbers<[1], [1], [0], [0], [0, 0, 1, 0], [], []>} : vector<8x32xf32>, vector<8x32xf32>, vector<8x8xf32> -> vector<8x8xf32>
      %c8_i32_10 = arith.constant 8 : i32
      %17 = arith.muli %arg1, %c8_i32_10 : i32
      %18 = tpu.iota {dimensions = array<i32: 0>} : vector<8x8xi32>
      %19 = vector.broadcast %17 : i32 to vector<8x8xi32>
      %20 = arith.addi %19, %18 : vector<8x8xi32>
      %c8_i32_11 = arith.constant 8 : i32
      %21 = arith.muli %arg2, %c8_i32_11 : i32
      %22 = tpu.iota {dimensions = array<i32: 1>} : vector<8x8xi32>
      %23 = vector.broadcast %21 : i32 to vector<8x8xi32>
      %24 = arith.addi %23, %22 : vector<8x8xi32>
      %25 = arith.cmpi sgt, %24, %20 : vector<8x8xi32>
      %cst_12 = arith.constant 1.000000e+10 : f32
      %cst_13 = arith.constant 0.000000e+00 : f32
      %26 = vector.broadcast %cst_12 : f32 to vector<8x8xf32>
      %27 = vector.broadcast %cst_13 : f32 to vector<8x8xf32>
      %28 = arith.select %25, %26, %27 : vector<8x8xi1>, vector<8x8xf32>
      %29 = arith.subf %16, %28 : vector<8x8xf32>
      %cst_14 = arith.constant 0.176776692 : f32
      %30 = vector.broadcast %cst_14 : f32 to vector<8x8xf32>
      %31 = arith.mulf %29, %30 : vector<8x8xf32>
      %c0_15 = arith.constant 0 : index
      %c0_16 = arith.constant 0 : index
      %32 = vector.load %arg7[%c0_15, %c0_16] : memref<8x1xf32, #tpu.memory_space<vmem>>, vector<8x1xf32>
      %cst_17 = arith.constant dense<0xFF800000> : vector<8xf32>
      %33 = vector.multi_reduction <maximumf>, %31, %cst_17 [1] : vector<8x8xf32> to vector<8xf32>
      %34 = vector.shape_cast %33 : vector<8xf32> to vector<8x1xf32>
      %35 = arith.maximumf %32, %34 : vector<8x1xf32>
      %36 = arith.subf %32, %35 : vector<8x1xf32>
      %37 = math.exp %36 : vector<8x1xf32>
      %38 = vector.broadcast %35 : vector<8x1xf32> to vector<8x8xf32>
      %39 = arith.subf %31, %38 : vector<8x8xf32>
      %40 = math.exp %39 : vector<8x8xf32>
      %c0_18 = arith.constant 0 : index
      %c0_19 = arith.constant 0 : index
      %c0_20 = arith.constant 0 : index
      %41 = vector.load %arg5[%c0_18, %c0_19, %c0_20] : memref<1x8x32xf32, #tpu.memory_space<vmem>>, vector<1x8x32xf32>
      %42 = vector.shape_cast %41 : vector<1x8x32xf32> to vector<8x32xf32>
      %c0_21 = arith.constant 0 : index
      %c0_22 = arith.constant 0 : index
      %43 = vector.load %arg8[%c0_21, %c0_22] : memref<8x1xf32, #tpu.memory_space<vmem>>, vector<8x1xf32>
      %44 = arith.mulf %37, %43 : vector<8x1xf32>
      %cst_23 = arith.constant dense<0.000000e+00> : vector<8xf32>
      %45 = vector.multi_reduction <add>, %40, %cst_23 [1] : vector<8x8xf32> to vector<8xf32>
      %46 = vector.shape_cast %45 : vector<8xf32> to vector<8x1xf32>
      %47 = arith.addf %44, %46 : vector<8x1xf32>
      %c0_24 = arith.constant 0 : index
      %c0_25 = arith.constant 0 : index
      %48 = vector.load %arg8[%c0_24, %c0_25] : memref<8x1xf32, #tpu.memory_space<vmem>>, vector<8x1xf32>
      tpu.vector_store %arg8[%c0_24, %c0_25], %47 {strides = array<i32>} : memref<8x1xf32, #tpu.memory_space<vmem>>, vector<8x1xf32>,
      %c0_26 = arith.constant 0 : index
      %c0_27 = arith.constant 0 : index
      %49 = vector.load %arg9[%c0_26, %c0_27] : memref<8x32xf32, #tpu.memory_space<vmem>>, vector<8x32xf32>
      %50 = vector.broadcast %37 : vector<8x1xf32> to vector<8x32xf32>
      %51 = arith.mulf %50, %49 : vector<8x32xf32>
      %cst_28 = arith.constant dense<0.000000e+00> : vector<8x32xf32>
      %52 = tpu.matmul %40, %42, %cst_28 {dimension_numbers = #tpu.dot_dimension_numbers<[1], [0], [0], [1], [0, 0, 1, 1], [], []>} : vector<8x8xf32>, vector<8x32xf32>, vector<8x32xf32> -> vector<8x32xf32>
      %53 = arith.addf %51, %52 : vector<8x32xf32>
      %c0_29 = arith.constant 0 : index
      %c0_30 = arith.constant 0 : index
      %54 = vector.load %arg9[%c0_29, %c0_30] : memref<8x32xf32, #tpu.memory_space<vmem>>, vector<8x32xf32>
      tpu.vector_store %arg9[%c0_29, %c0_30], %53 {strides = array<i32>} : memref<8x32xf32, #tpu.memory_space<vmem>>, vector<8x32xf32>,
      %c0_31 = arith.constant 0 : index
      %c0_32 = arith.constant 0 : index
      %55 = vector.load %arg7[%c0_31, %c0_32] : memref<8x1xf32, #tpu.memory_space<vmem>>, vector<8x1xf32>
      tpu.vector_store %arg7[%c0_31, %c0_32], %35 {strides = array<i32>} : memref<8x1xf32, #tpu.memory_space<vmem>>, vector<8x1xf32>,
    } else {
    }
    %c0_i32_3 = arith.constant 0 : i32
    %9 = arith.cmpi eq, %arg2, %c0_i32_3 : i32
    %10 = arith.extui %9 : i1 to i32
    %c0_i32_4 = arith.constant 0 : i32
    %11 = arith.cmpi ne, %10, %c0_i32_4 : i32
    scf.if %11 {
      %c0 = arith.constant 0 : index
      %c0_5 = arith.constant 0 : index
      %12 = vector.load %arg8[%c0, %c0_5] : memref<8x1xf32, #tpu.memory_space<vmem>>, vector<8x1xf32>
      %13 = tpu.reciprocal %12 : vector<8x1xf32> -> vector<8x1xf32>
      %c0_6 = arith.constant 0 : index
      %c0_7 = arith.constant 0 : index
      %14 = vector.load %arg9[%c0_6, %c0_7] : memref<8x32xf32, #tpu.memory_space<vmem>>, vector<8x32xf32>
      %15 = vector.broadcast %13 : vector<8x1xf32> to vector<8x32xf32>
      %16 = arith.mulf %14, %15 : vector<8x32xf32>
      %c0_8 = arith.constant 0 : index
      %c0_9 = arith.constant 0 : index
      %c0_10 = arith.constant 0 : index
      %17 = vector.load %arg6[%c0_8, %c0_9, %c0_10] : memref<1x8x32xf32, #tpu.memory_space<vmem>>, vector<1x8x32xf32>
      %18 = vector.shape_cast %17 : vector<1x8x32xf32> to vector<8x32xf32>
      %19 = vector.shape_cast %16 : vector<8x32xf32> to vector<1x8x32xf32>
      tpu.vector_store %arg6[%c0_8, %c0_9, %c0_10], %19 {strides = array<i32>} : memref<1x8x32xf32, #tpu.memory_space<vmem>>, vector<1x8x32xf32>,
    } else {
    }
    return
  }
  func.func @transform_0(%arg0: i32, %arg1: i32, %arg2: i32) -> (i32, i32, i32) {
    %c0_i32 = arith.constant 0 : i32
    %c0_i32_0 = arith.constant 0 : i32
    return %arg0, %arg1, %c0_i32 : i32, i32, i32
  }
  func.func @transform_1(%arg0: i32, %arg1: i32, %arg2: i32) -> (i32, i32, i32) {
    %c0_i32 = arith.constant 0 : i32
    %c0_i32_0 = arith.constant 0 : i32
    return %arg0, %arg2, %c0_i32 : i32, i32, i32
  }
  func.func @transform_2(%arg0: i32, %arg1: i32, %arg2: i32) -> (i32, i32, i32) {
    %c0_i32 = arith.constant 0 : i32
    %c0_i32_0 = arith.constant 0 : i32
    return %arg0, %arg2, %c0_i32 : i32, i32, i32
  }
  func.func @transform_3(%arg0: i32, %arg1: i32, %arg2: i32) -> (i32, i32, i32) {
    %c0_i32 = arith.constant 0 : i32
    %c0_i32_0 = arith.constant 0 : i32
    return %arg0, %arg1, %c0_i32 : i32, i32, i32
  }
}

</mosaic_0001>

<llo_original>
// kernel: tpu_custom_call.1
$region0: #{tpu_custom_call.1}
  #allocation0 [shape = 'u32[]', space=smem, size = 0x4, offset = 0x4, fixed_abs, tag = 'smem constant byte address 0x4 - core index']
  #allocation1 [shape = 'u32[144,128]{1,0:T(1,128)}', space=vmem, size = 0x12000, scoped, tag = 'internal scratch']
  #allocation2 [shape = 'f32[8,1]{1,0:T(8,128)}', space=vmem, size = 0x1000, scoped, tag = 'scratch operand']
  #allocation3 [shape = 'f32[8,1]{1,0:T(8,128)}', space=vmem, size = 0x1000, scoped, tag = 'scratch operand']
  #allocation4 [shape = 'f32[8,32]{1,0:T(8,128)}', space=vmem, size = 0x1000, scoped, tag = 'scratch operand']
  %s0 = inlined_call_operand.hbm [shape: f32[2,8,32], index: 0, kind: input, shape index: {}]
  %s1 = inlined_call_operand.hbm [shape: f32[2,8,32], index: 1, kind: input, shape index: {}]
  %s2 = inlined_call_operand.hbm [shape: f32[2,8,32], index: 2, kind: input, shape index: {}]
  %s3 = inlined_call_operand.hbm [shape: f32[2,8,32], index: 3, kind: output, shape index: {}]
  %s4 = sld [smem:[#allocation0]]
  $region69: #{tpu_custom_call.1} parent=0
    _
  %s6 = ssub.s32 1, %s4
  %s7 = scalar_select 0, %s6, %s4
  $region1: #{tpu_custom_call.1} parent=0
    #allocation5 [shape = 'u8[8192]{0}', space=vmem, size = 0x2000, scoped, tag = 'input window, operand 0']
    #allocation6 [shape = 's32[2]{0}', space=sflag, size = 0x8, scoped, tag = 'scoped memory for tpu_custom_call.1']
    #allocation7 [shape = 's32[2]{0}', space=sflag, size = 0x8, scoped, tag = 'scoped memory for tpu_custom_call.1']
    #allocation8 [shape = 'u8[8192]{0}', space=vmem, size = 0x2000, scoped, tag = 'input window, operand 1']
    #allocation9 [shape = 's32[2]{0}', space=sflag, size = 0x8, scoped, tag = 'scoped memory for tpu_custom_call.1']
    #allocation10 [shape = 'u8[8192]{0}', space=vmem, size = 0x2000, scoped, tag = 'input window, operand 2']
    #allocation11 [shape = 'u8[8192]{0}', space=vmem, size = 0x2000, scoped, tag = 'output window, operand 0']
    %8 = vsyncpa [#allocation6], 0
    %s9 = scalar_lea.sflag [#allocation6], 1
    %10 = vsyncpa %s9, 0
    %11 = vsyncpa [#allocation9], 0
    %s12 = scalar_lea.sflag [#allocation9], 1
    %13 = vsyncpa %s12, 0
    %14 = vsyncpa [#allocation7], 0
    %s15 = scalar_lea.sflag [#allocation7], 1
    %16 = vsyncpa %s15, 0
    loop: start=0, step=1, limit=4
    $region2: #{tpu_custom_call.1} parent=1 // loop_pre_header
      _
    $region3: #{tpu_custom_call.1} parent=1 // loop_header
      %s18 = sphi 0, %s22
      %p19 = scmp.ge.s32.totalorder %s18, 4
      %s25 = sphi 0, %s44
      %s26 = sphi 0, %s40
      %s27 = sphi 0, %s36
      %s28 = sphi 0, %s25
      %s29 = sphi 0, %s26
      %s30 = sphi 0, %s27
      %s31 = sphi 0, %s28
      %s32 = sphi 0, %s29
      %s33 = sphi 0, %s30
      %s49 = sphi 0, %s51
      %s52 = sphi 0, %s49
      %s53 = sphi 0, %s52
      %s69 = sphi 0, %s53
      %s77 = sphi 0, %s79
      %s80 = sphi 0, %s77
      %s81 = sphi 0, %s80
      %s97 = sphi 0, %s81
      %s105 = sphi 0, %s107
      %s108 = sphi 0, %s105
      %s109 = sphi 0, %s108
      %s125 = sphi 0, %s109
      %s133 = sphi 0, %s135
      %s136 = sphi 0, %s133
      %s137 = sphi 0, %s136
      %s153 = sphi 0, %s137
    $region4: #{tpu_custom_call.1} parent=1 // loop_header_branch
      %21 = sbr.rel (%p19) target = $region8
    $region5: #{tpu_custom_call.1} parent=1 // loop_body
      %s23 = ssub.s32 %s18, 1
      %s24 = ssub.s32 %s18, 2
      %s34 = sadd.s32 1, %s27
      %p35 = scmp.ge.s32.totalorder %s34, 1
      %s36 = scalar_select %p35, 0, %s34
      %s37 = sadd.s32 1, %s26
      %s38 = scalar_select %p35, %s37, %s26
      %p39 = scmp.ge.s32.totalorder %s38, 1
      %s40 = scalar_select %p39, 0, %s38
      %s41 = sadd.s32 1, %s25
      %s42 = scalar_select %p39, %s41, %s25
      %p43 = scmp.ge.s32.totalorder %s42, 2
      %s44 = scalar_select %p43, 0, %s42
      %s45 = ssub.s32 %s25, %s44
      %s46 = ssub.s32 %s26, %s40
      %s47 = sor.u32 %s45, %s46
      %p48 = scmp.eq.s32.totalorder %s47, 0
      %s50 = sadd.s32 %s49, 1
      %s51 = scalar_select %p48, %s49, %s50
      %p54 = pneg %p48
      %p55 = scmp.eq.s32.totalorder %s18, 1
      %p56 = por %p54, %p55
      %p57 = scmp.ne.s32.totalorder %s49, %s52
      %p58 = scmp.eq.s32.totalorder %s18, 0
      %p59 = por %p57, %p58
      %p60 = scmp.ne.s32.totalorder %s49, %s52
      %p61 = scmp.eq.s32.totalorder %s23, 1
      %p62 = por %p60, %p61
      %p63 = scmp.ne.s32.totalorder %s52, %s53
      %p64 = scmp.eq.s32.totalorder %s23, 0
      %p65 = por %p63, %p64
      %p66 = scmp.ne.s32.totalorder %s52, %s53
      %p67 = scmp.eq.s32.totalorder %s24, 1
      %p68 = por %p66, %p67
      %p70 = scmp.ne.s32.totalorder %s53, %s69
      %p71 = scmp.eq.s32.totalorder %s24, 0
      %p72 = por %p70, %p71
      %s73 = ssub.s32 %s25, %s44
      %s74 = ssub.s32 %s27, %s36
      %s75 = sor.u32 %s73, %s74
      %p76 = scmp.eq.s32.totalorder %s75, 0
      %s78 = sadd.s32 %s77, 1
      %s79 = scalar_select %p76, %s77, %s78
      %p82 = pneg %p76
      %p83 = scmp.eq.s32.totalorder %s18, 1
      %p84 = por %p82, %p83
      %p85 = scmp.ne.s32.totalorder %s77, %s80
      %p86 = scmp.eq.s32.totalorder %s18, 0
      %p87 = por %p85, %p86
      %p88 = scmp.ne.s32.totalorder %s77, %s80
      %p89 = scmp.eq.s32.totalorder %s23, 1
      %p90 = por %p88, %p89
      %p91 = scmp.ne.s32.totalorder %s80, %s81
      %p92 = scmp.eq.s32.totalorder %s23, 0
      %p93 = por %p91, %p92
      %p94 = scmp.ne.s32.totalorder %s80, %s81
      %p95 = scmp.eq.s32.totalorder %s24, 1
      %p96 = por %p94, %p95
      %p98 = scmp.ne.s32.totalorder %s81, %s97
      %p99 = scmp.eq.s32.totalorder %s24, 0
      %p100 = por %p98, %p99
      %s101 = ssub.s32 %s25, %s44
      %s102 = ssub.s32 %s27, %s36
      %s103 = sor.u32 %s101, %s102
      %p104 = scmp.eq.s32.totalorder %s103, 0
      %s106 = sadd.s32 %s105, 1
      %s107 = scalar_select %p104, %s105, %s106
      %p110 = pneg %p104
      %p111 = scmp.eq.s32.totalorder %s18, 1
      %p112 = por %p110, %p111
      %p113 = scmp.ne.s32.totalorder %s105, %s108
      %p114 = scmp.eq.s32.totalorder %s18, 0
      %p115 = por %p113, %p114
      %p116 = scmp.ne.s32.totalorder %s105, %s108
      %p117 = scmp.eq.s32.totalorder %s23, 1
      %p118 = por %p116, %p117
      %p119 = scmp.ne.s32.totalorder %s108, %s109
      %p120 = scmp.eq.s32.totalorder %s23, 0
      %p121 = por %p119, %p120
      %p122 = scmp.ne.s32.totalorder %s108, %s109
      %p123 = scmp.eq.s32.totalorder %s24, 1
      %p124 = por %p122, %p123
      %p126 = scmp.ne.s32.totalorder %s109, %s125
      %p127 = scmp.eq.s32.totalorder %s24, 0
      %p128 = por %p126, %p127
      %s129 = ssub.s32 %s25, %s44
      %s130 = ssub.s32 %s26, %s40
      %s131 = sor.u32 %s129, %s130
      %p132 = scmp.eq.s32.totalorder %s131, 0
      %s134 = sadd.s32 %s133, 1
      %s135 = scalar_select %p132, %s133, %s134
      %p138 = pneg %p132
      %p139 = scmp.eq.s32.totalorder %s18, 1
      %p140 = por %p138, %p139
      %p141 = scmp.ne.s32.totalorder %s133, %s136
      %p142 = scmp.eq.s32.totalorder %s18, 0
      %p143 = por %p141, %p142
      %p144 = scmp.ne.s32.totalorder %s133, %s136
      %p145 = scmp.eq.s32.totalorder %s23, 1
      %p146 = por %p144, %p145
      %p147 = scmp.ne.s32.totalorder %s136, %s137
      %p148 = scmp.eq.s32.totalorder %s23, 0
      %p149 = por %p147, %p148
      %p150 = scmp.ne.s32.totalorder %s136, %s137
      %p151 = scmp.eq.s32.totalorder %s24, 1
      %p152 = por %p150, %p151
      %p154 = scmp.ne.s32.totalorder %s137, %s153
      %p155 = scmp.eq.s32.totalorder %s24, 0
      %p156 = por %p154, %p155
      %p157 = scmp.le.s32.totalorder 1, %s18
      %p158 = scmp.lt.s32.totalorder %s18, 3
      %p159 = pnand %p157, %p158
      %p160 = pneg %p159
      // Predicated region
      $region9: #{tpu_custom_call.1} parent=5 // pred_check
        _
      $region10: #{tpu_custom_call.1} parent=5 // pred_check_branch
        %162 = sbr.rel (%p159) target = $region12
      $region11: #{tpu_custom_call.1} parent=5 // pred_region
        %s163 = ssub.s32 %s18, 1
      $region12: #{tpu_custom_call.1} parent=5 // pred_fallthru
        _
      %p164 = scmp.lt.s32.totalorder %s18, 2
      // Predicated region
      $region13: #{tpu_custom_call.1} parent=5 // pred_check
        %p165 = pneg %p164
      $region14: #{tpu_custom_call.1} parent=5 // pred_check_branch
        %167 = sbr.rel (%p165) target = $region16
      $region15: #{tpu_custom_call.1} parent=5 // pred_region
        // Predicated region
        $region17: #{tpu_custom_call.1} parent=15 // pred_check
          %p168 = pneg %p59
        $region18: #{tpu_custom_call.1} parent=15 // pred_check_branch
          %170 = sbr.rel (%p168) target = $region20
        $region19: #{tpu_custom_call.1} parent=15 // pred_region
          %s171 = sand.u32 %s49, 1
          %s172 = scalar_lea.sflag [#allocation6], %s171
          %s173 = sand.u32 %s49, 1
          %s174 = smul.addr %s173, 8
          %s175 = scalar_lea.vmem [#allocation5], %s174
          %s177 = ssub.s32 128, 128
          %178 = vsyncadd %s172, %s177
          %s179 = sadd.s32 %s26, %s25
          %s180 = smul.addr %s179, 128
          %s181 = scalar_lea.hbm %s0, %s180
          %s183 = sshll.u32 %s175, 4
          %s184 = int_to_ptr.vmem [resolvable:$true] %s183
          %186 = dma.hbm_to_vmem [thread:$0]  %s181, 128, %s184, %s172
        $region20: #{tpu_custom_call.1} parent=15 // pred_fallthru
          _
        // Predicated region
        $region21: #{tpu_custom_call.1} parent=15 // pred_check
          %p187 = pneg %p87
        $region22: #{tpu_custom_call.1} parent=15 // pred_check_branch
          %189 = sbr.rel (%p187) target = $region24
        $region23: #{tpu_custom_call.1} parent=15 // pred_region
          %s190 = sand.u32 %s18, 1
          %s191 = scalar_lea.sflag [#allocation9], %s190
          %s192 = sand.u32 %s77, 1
          %s193 = smul.addr %s192, 8
          %s194 = scalar_lea.vmem [#allocation8], %s193
          %s196 = ssub.s32 128, 128
          %197 = vsyncadd %s191, %s196
          %s198 = sadd.s32 %s27, %s25
          %s199 = smul.addr %s198, 128
          %s200 = scalar_lea.hbm %s1, %s199
          %s202 = sshll.u32 %s194, 4
          %s203 = int_to_ptr.vmem [resolvable:$true] %s202
          %205 = dma.hbm_to_vmem [thread:$0]  %s200, 128, %s203, %s191
        $region24: #{tpu_custom_call.1} parent=15 // pred_fallthru
          _
        // Predicated region
        $region25: #{tpu_custom_call.1} parent=15 // pred_check
          %p206 = pneg %p115
        $region26: #{tpu_custom_call.1} parent=15 // pred_check_branch
          %208 = sbr.rel (%p206) target = $region28
        $region27: #{tpu_custom_call.1} parent=15 // pred_region
          %s209 = sand.u32 %s18, 1
          %s210 = scalar_lea.sflag [#allocation9], %s209
          %s211 = sand.u32 %s105, 1
          %s212 = smul.addr %s211, 8
          %s213 = scalar_lea.vmem [#allocation10], %s212
          %s215 = ssub.s32 128, 128
          %216 = vsyncadd %s210, %s215
          %s217 = sadd.s32 %s27, %s25
          %s218 = smul.addr %s217, 128
          %s219 = scalar_lea.hbm %s2, %s218
          %s221 = sshll.u32 %s213, 4
          %s222 = int_to_ptr.vmem [resolvable:$true] %s221
          %224 = dma.hbm_to_vmem [thread:$0]  %s219, 128, %s222, %s210
        $region28: #{tpu_custom_call.1} parent=15 // pred_fallthru
          _
      $region16: #{tpu_custom_call.1} parent=5 // pred_fallthru
        _
      %p225 = scmp.le.s32.totalorder 1, %s18
      %p226 = scmp.lt.s32.totalorder %s18, 3
      %p227 = pnand %p225, %p226
      %p228 = pneg %p227
      // Predicated region
      $region29: #{tpu_custom_call.1} parent=5 // pred_check
        _
      $region30: #{tpu_custom_call.1} parent=5 // pred_check_branch
        %230 = sbr.rel (%p227) target = $region32
      $region31: #{tpu_custom_call.1} parent=5 // pred_region
        %s231 = ssub.s32 %s18, 1
        %s232 = sand.u32 %s52, 1
        %s233 = scalar_lea.sflag [#allocation6], %s232
        %s234 = sand.u32 %s52, 1
        %s235 = smul.addr %s234, 8
        %s236 = scalar_lea.vmem [#allocation5], %s235
        // Predicated region
        $region33: #{tpu_custom_call.1} parent=31 // pred_check
          %p237 = pneg %p65
        $region34: #{tpu_custom_call.1} parent=31 // pred_check_branch
          %239 = sbr.rel (%p237) target = $region36
        $region35: #{tpu_custom_call.1} parent=31 // pred_region
          %240 = dma.done %s233, 128
        $region36: #{tpu_custom_call.1} parent=31 // pred_fallthru
          _
        %s241 = sand.u32 %s23, 1
        %s242 = scalar_lea.sflag [#allocation9], %s241
        %s243 = sand.u32 %s80, 1
        %s244 = smul.addr %s243, 8
        %s245 = scalar_lea.vmem [#allocation8], %s244
        // Predicated region
        $region37: #{tpu_custom_call.1} parent=31 // pred_check
          %p246 = pneg %p93
        $region38: #{tpu_custom_call.1} parent=31 // pred_check_branch
          %248 = sbr.rel (%p246) target = $region40
        $region39: #{tpu_custom_call.1} parent=31 // pred_region
          %249 = dma.done %s242, 128
        $region40: #{tpu_custom_call.1} parent=31 // pred_fallthru
          _
        %s250 = sand.u32 %s23, 1
        %s251 = scalar_lea.sflag [#allocation9], %s250
        %s252 = sand.u32 %s108, 1
        %s253 = smul.addr %s252, 8
        %s254 = scalar_lea.vmem [#allocation10], %s253
        // Predicated region
        $region41: #{tpu_custom_call.1} parent=31 // pred_check
          %p255 = pneg %p121
        $region42: #{tpu_custom_call.1} parent=31 // pred_check_branch
          %257 = sbr.rel (%p255) target = $region44
        $region43: #{tpu_custom_call.1} parent=31 // pred_region
          %258 = dma.done %s251, 128
        $region44: #{tpu_custom_call.1} parent=31 // pred_fallthru
          _
        %s259 = sand.u32 %s52, 1
        %s260 = scalar_lea.sflag [#allocation6], %s259
        %s261 = sand.u32 %s52, 1
        %s262 = smul.addr %s261, 8
        %s263 = scalar_lea.vmem [#allocation5], %s262
        %p264 = pneg %p65
        %p265 = pneg %p62
        %s266 = sand.u32 %s23, 1
        %s267 = scalar_lea.sflag [#allocation9], %s266
        %s268 = sand.u32 %s80, 1
        %s269 = smul.addr %s268, 8
        %s270 = scalar_lea.vmem [#allocation8], %s269
        %p271 = pneg %p93
        %p272 = pneg %p90
        %s273 = sand.u32 %s23, 1
        %s274 = scalar_lea.sflag [#allocation9], %s273
        %s275 = sand.u32 %s108, 1
        %s276 = smul.addr %s275, 8
        %s277 = scalar_lea.vmem [#allocation10], %s276
        %p278 = pneg %p121
        %p279 = pneg %p118
        %p280 = pneg %p149
        %p281 = pneg %p146
        %s282 = sand.u32 %s136, 1
        %s283 = scalar_lea.sflag [#allocation7], %s282
        %s284 = sand.u32 %s136, 1
        %s285 = smul.addr %s284, 8
        %s286 = scalar_lea.vmem [#allocation11], %s285
        %p287 = scmp.eq.s32.totalorder %s30, 0
        // Predicated region
        $region45: #{tpu_custom_call.1} parent=31 // pred_check
          %p288 = pneg %p287
        $region46: #{tpu_custom_call.1} parent=31 // pred_check_branch
          %290 = sbr.rel (%p288) target = $region48
        $region47: #{tpu_custom_call.1} parent=31 // pred_region
          %vm291 = vcmask 7168
          %292 = vst.msk [vmem:[#allocation2] sm:$0xff] %vm291, -inf
          %293 = vst.msk [vmem:[#allocation3] sm:$0xff] %vm291, 0.0
          %vm294 = vcmask 261120
          %295 = vst.msk [vmem:[#allocation4] sm:$0xff] %vm294, 0.0
        $region48: #{tpu_custom_call.1} parent=31 // pred_fallthru
          _
        %s296 = smul.u32 %s30, 8
        %s297 = smul.u32 %s29, 8
        %s298 = sadd.s32 %s297, 7
        %p299 = scmp.le.s32.totalorder %s296, %s298
        // Predicated region
        $region49: #{tpu_custom_call.1} parent=31 // pred_check
          %p300 = pneg %p299
        $region50: #{tpu_custom_call.1} parent=31 // pred_check_branch
          %302 = sbr.rel (%p300) target = $region52
        $region51: #{tpu_custom_call.1} parent=31 // pred_region
          %v303 = vld [vmem:[%s236] sm:$0xff]
          %v304 = vld [vmem:[%s245] sm:$0xff]
          %vm305 = vcmask 261120
          %v307 = vsel %vm305, %v303, 0
          %v310 = vsel %vm305, %v304, 0
          %312 = vmatprep.subr.mxu0 0.0
          %313 = vmatpush1.xpose.msra.mxu0 0.0
          %314 = vmatprep.subr.mxu0 0.0
          %315 = vmatpush1.xpose.msra.mxu0 0.0
          %316 = vmatprep.subr.mxu0 0.0
          %317 = vmatpush1.xpose.msra.mxu0 0.0
          %318 = vmatprep.subr.mxu0 0.0
          %319 = vmatpush1.xpose.msra.mxu0 0.0
          %320 = vmatprep.subr.mxu0 0.0
          %321 = vmatpush1.xpose.msra.mxu0 0.0
          %322 = vmatprep.subr.mxu0 0.0
          %323 = vmatpush1.xpose.msra.mxu0 0.0
          %324 = vmatprep.subr.mxu0 0.0
          %325 = vmatpush1.xpose.msra.mxu0 0.0
          %326 = vmatprep.subr.mxu0 0.0
          %327 = vmatpush1.xpose.msra.mxu0 0.0
          %328 = vmatprep.subr.mxu0 0.0
          %329 = vmatpush1.xpose.msra.mxu0 0.0
          %330 = vmatprep.subr.mxu0 0.0
          %331 = vmatpush1.xpose.msra.mxu0 0.0
          %332 = vmatprep.subr.mxu0 0.0
          %333 = vmatpush1.xpose.msra.mxu0 0.0
          %334 = vmatprep.subr.mxu0 0.0
          %335 = vmatpush1.xpose.msra.mxu0 0.0
          %336 = vmatprep.subr.mxu0 0.0
          %337 = vmatpush1.xpose.msra.mxu0 0.0
          %338 = vmatprep.subr.mxu0 0.0
          %339 = vmatpush1.xpose.msra.mxu0 0.0
          %340 = vmatprep.subr.mxu0 0.0
          %341 = vmatpush1.xpose.msra.mxu0 0.0
          %342 = vmatprep.subr.mxu0 0.0
          %343 = vmatpush1.xpose.msra.mxu0 %v310
          %344 = vmatprep.subr.mxu0 0.0
          %345 = vmatpush2.xpose.msra.mxu0 0.0
          %346 = vmatprep.subr.mxu0 0.0
          %347 = vmatpush2.xpose.msra.mxu0 0.0
          %348 = vmatprep.subr.mxu0 0.0
          %349 = vmatpush2.xpose.msra.mxu0 0.0
          %350 = vmatprep.subr.mxu0 0.0
          %351 = vmatpush2.xpose.msra.mxu0 0.0
          %352 = vmatprep.subr.mxu0 0.0
          %353 = vmatpush2.xpose.msra.mxu0 0.0
          %354 = vmatprep.subr.mxu0 0.0
          %355 = vmatpush2.xpose.msra.mxu0 0.0
          %356 = vmatprep.subr.mxu0 0.0
          %357 = vmatpush2.xpose.msra.mxu0 0.0
          %358 = vmatprep.subr.mxu0 0.0
          %359 = vmatpush2.xpose.msra.mxu0 0.0
          %360 = vmatprep.subr.mxu0 0.0
          %361 = vmatpush2.xpose.msra.mxu0 0.0
          %362 = vmatprep.subr.mxu0 0.0
          %363 = vmatpush2.xpose.msra.mxu0 0.0
          %364 = vmatprep.subr.mxu0 0.0
          %365 = vmatpush2.xpose.msra.mxu0 0.0
          %366 = vmatprep.subr.mxu0 0.0
          %367 = vmatpush2.xpose.msra.mxu0 0.0
          %368 = vmatprep.subr.mxu0 0.0
          %369 = vmatpush2.xpose.msra.mxu0 0.0
          %370 = vmatprep.subr.mxu0 0.0
          %371 = vmatpush2.xpose.msra.mxu0 0.0
          %372 = vmatprep.subr.mxu0 0.0
          %373 = vmatpush2.xpose.msra.mxu0 0.0
          %374 = vmatprep.subr.mxu0 0.0
          %375 = vmatpush2.xpose.msra.mxu0 0.0
          %376 = vmatprep.mubr.f32.mxu0 0.0
          %377 = vmatmul.mubr.f32.gmra.mxu0 %v307
          %v378 = vpop.f32.mrf.mxu0
          %v379 = vadd.f32 0.0, %v378
          %v380 = vpop.f32.mrf.mxu0
          %381 = vdwg.mxu0
          %v382 = vlaneseq
          %v383 = vshrl.u32 %v382, 7
          %v384 = vstv %s297
          %v385 = vadd.s32 %v384, %v383
          %v386 = vlaneseq
          %v387 = vand.u32 %v386, 127
          %v388 = vstv %s296
          %v389 = vadd.s32 %v388, %v387
          %vm390 = vcmp.gt.s32.totalorder %v389, %v385
          %v391 = vsel %vm390, 1e+10, 0.0
          %v392 = vsub.f32 %v379, %v391
          %v393 = vmul.f32 %v392, 0.17677669
          %v394 = vld [vmem:[#allocation2] sm:$0xff]
          %vm395 = vcmask 64512
          %v396 = vsel %vm395, %v393, -inf
          %397 = vmax.xlane.f32.xlu0 %v396
          %v398 = vpop.xlane.xlu0 %397
          %v399 = vmax.f32 %v394, %v398
          %v400 = vsub.f32 %v394, %v399
          %v401 = vmul.f32 %v400, 1.442695
          %v402 = vpow.pop %v401
          %404 = vset.pattern.permute.xlu0 0
          %405 = vperm.xlu0 %404, %v399
          %v406 = vpop.permute.xlu0 %405
          %v408 = vsub.f32 %v393, %v406
          %v409 = vmul.f32 %v408, 1.442695
          %v410 = vpow.pop %v409
          %v411 = vld [vmem:[%s254] sm:$0xff]
          %v412 = vld [vmem:[#allocation3] sm:$0xff]
          %v413 = vmul.f32 %v402, %v412
          %v414 = vsel %vm395, %v410, 0.0
          %415 = vadd.xlane.f32.xlu0 %v414
          %v416 = vpop.xlane.xlu0 %415
          %v417 = vadd.f32 %v413, %v416
          %vm418 = vcmask 7168
          %419 = vst.msk [vmem:[#allocation3] sm:$0xff] %vm418, %v417
          %v420 = vld [vmem:[#allocation4] sm:$0xff]
          %422 = vset.pattern.permute.xlu0 0
          %423 = vperm.xlu0 %422, %v402
          %v424 = vpop.permute.xlu0 %423
          %v426 = vmul.f32 %v424, %v420
          %v428 = vsel %vm395, %v410, 0
          %430 = vmatprep.subr.mxu0 0.0
          %431 = vmatpush1.msra.mxu0 0.0
          %432 = vmatprep.subr.mxu0 0.0
          %433 = vmatpush1.msra.mxu0 0.0
          %434 = vmatprep.subr.mxu0 0.0
          %435 = vmatpush1.msra.mxu0 0.0
          %436 = vmatprep.subr.mxu0 0.0
          %437 = vmatpush1.msra.mxu0 0.0
          %438 = vmatprep.subr.mxu0 0.0
          %439 = vmatpush1.msra.mxu0 0.0
          %440 = vmatprep.subr.mxu0 0.0
          %441 = vmatpush1.msra.mxu0 0.0
          %442 = vmatprep.subr.mxu0 0.0
          %443 = vmatpush1.msra.mxu0 0.0
          %444 = vmatprep.subr.mxu0 0.0
          %445 = vmatpush1.msra.mxu0 0.0
          %446 = vmatprep.subr.mxu0 0.0
          %447 = vmatpush1.msra.mxu0 0.0
          %448 = vmatprep.subr.mxu0 0.0
          %449 = vmatpush1.msra.mxu0 0.0
          %450 = vmatprep.subr.mxu0 0.0
          %451 = vmatpush1.msra.mxu0 0.0
          %452 = vmatprep.subr.mxu0 0.0
          %453 = vmatpush1.msra.mxu0 0.0
          %454 = vmatprep.subr.mxu0 0.0
          %455 = vmatpush1.msra.mxu0 0.0
          %456 = vmatprep.subr.mxu0 0.0
          %457 = vmatpush1.msra.mxu0 0.0
          %458 = vmatprep.subr.mxu0 0.0
          %459 = vmatpush1.msra.mxu0 0.0
          %460 = vmatprep.subr.mxu0 0.0
          %461 = vmatpush1.msra.mxu0 %v411
          %462 = vmatprep.subr.mxu0 0.0
          %463 = vmatpush2.msra.mxu0 0.0
          %464 = vmatprep.subr.mxu0 0.0
          %465 = vmatpush2.msra.mxu0 0.0
          %466 = vmatprep.subr.mxu0 0.0
          %467 = vmatpush2.msra.mxu0 0.0
          %468 = vmatprep.subr.mxu0 0.0
          %469 = vmatpush2.msra.mxu0 0.0
          %470 = vmatprep.subr.mxu0 0.0
          %471 = vmatpush2.msra.mxu0 0.0
          %472 = vmatprep.subr.mxu0 0.0
          %473 = vmatpush2.msra.mxu0 0.0
          %474 = vmatprep.subr.mxu0 0.0
          %475 = vmatpush2.msra.mxu0 0.0
          %476 = vmatprep.subr.mxu0 0.0
          %477 = vmatpush2.msra.mxu0 0.0
          %478 = vmatprep.subr.mxu0 0.0
          %479 = vmatpush2.msra.mxu0 0.0
          %480 = vmatprep.subr.mxu0 0.0
          %481 = vmatpush2.msra.mxu0 0.0
          %482 = vmatprep.subr.mxu0 0.0
          %483 = vmatpush2.msra.mxu0 0.0
          %484 = vmatprep.subr.mxu0 0.0
          %485 = vmatpush2.msra.mxu0 0.0
          %486 = vmatprep.subr.mxu0 0.0
          %487 = vmatpush2.msra.mxu0 0.0
          %488 = vmatprep.subr.mxu0 0.0
          %489 = vmatpush2.msra.mxu0 0.0
          %490 = vmatprep.subr.mxu0 0.0
          %491 = vmatpush2.msra.mxu0 0.0
          %492 = vmatprep.subr.mxu0 0.0
          %493 = vmatpush2.msra.mxu0 0.0
          %494 = vmatprep.mubr.f32.mxu0 0.0
          %495 = vmatmul.mubr.f32.gmra.mxu0 %v428
          %v496 = vpop.f32.mrf.mxu0
          %v497 = vadd.f32 0.0, %v496
          %v498 = vpop.f32.mrf.mxu0
          %499 = vdwg.mxu0
          %v500 = vadd.f32 %v426, %v497
          %501 = vst.msk [vmem:[#allocation4] sm:$0xff] %vm305, %v500
          %502 = vst.msk [vmem:[#allocation2] sm:$0xff] %vm418, %v399
        $region52: #{tpu_custom_call.1} parent=31 // pred_fallthru
          _
        // Predicated region
        $region53: #{tpu_custom_call.1} parent=31 // pred_check
          %p503 = pneg %p287
        $region54: #{tpu_custom_call.1} parent=31 // pred_check_branch
          %505 = sbr.rel (%p503) target = $region56
        $region55: #{tpu_custom_call.1} parent=31 // pred_region
          %v506 = vld [vmem:[#allocation3] sm:$0xff]
          %v507 = vrcp.pop %v506
          %v508 = vld [vmem:[#allocation4] sm:$0xff]
          %510 = vset.pattern.permute.xlu0 0
          %511 = vperm.xlu0 %510, %v507
          %v512 = vpop.permute.xlu0 %511
          %v514 = vmul.f32 %v508, %v512
          %vm515 = vcmask 261120
          %516 = vst.msk [vmem:[%s286] sm:$0xff] %vm515, %v514
        $region56: #{tpu_custom_call.1} parent=31 // pred_fallthru
          _
        %s517 = sand.u32 %s136, 1
        %s518 = scalar_lea.sflag [#allocation7], %s517
        %s519 = sand.u32 %s136, 1
        %s520 = smul.addr %s519, 8
        %s521 = scalar_lea.vmem [#allocation11], %s520
        // Predicated region
        $region57: #{tpu_custom_call.1} parent=31 // pred_check
          %p522 = pneg %p146
        $region58: #{tpu_custom_call.1} parent=31 // pred_check_branch
          %524 = sbr.rel (%p522) target = $region60
        $region59: #{tpu_custom_call.1} parent=31 // pred_region
          %s526 = ssub.s32 128, 128
          %527 = vsyncadd %s518, %s526
          %s528 = sadd.s32 %s29, %s28
          %s529 = smul.addr %s528, 128
          %s530 = scalar_lea.hbm %s3, %s529
          %s532 = sshll.u32 %s521, 4
          %s533 = int_to_ptr.vmem [resolvable:$true] %s532
          %535 = dma.vmem_to_hbm [thread:$0]  %s533, 128, %s530, %s518
        $region60: #{tpu_custom_call.1} parent=31 // pred_fallthru
          _
      $region32: #{tpu_custom_call.1} parent=5 // pred_fallthru
        _
      %p536 = scmp.le.s32.totalorder 2, %s18
      // Predicated region
      $region61: #{tpu_custom_call.1} parent=5 // pred_check
        %p537 = pneg %p536
      $region62: #{tpu_custom_call.1} parent=5 // pred_check_branch
        %539 = sbr.rel (%p537) target = $region64
      $region63: #{tpu_custom_call.1} parent=5 // pred_region
        %s540 = ssub.s32 %s18, 2
        // Predicated region
        $region65: #{tpu_custom_call.1} parent=63 // pred_check
          %p541 = pneg %p152
        $region66: #{tpu_custom_call.1} parent=63 // pred_check_branch
          %543 = sbr.rel (%p541) target = $region68
        $region67: #{tpu_custom_call.1} parent=63 // pred_region
          %s544 = sand.u32 %s137, 1
          %s545 = scalar_lea.sflag [#allocation7], %s544
          %s546 = sand.u32 %s137, 1
          %s547 = smul.addr %s546, 8
          %s548 = scalar_lea.vmem [#allocation11], %s547
          %549 = dma.done %s545, 128
        $region68: #{tpu_custom_call.1} parent=63 // pred_fallthru
          _
      $region64: #{tpu_custom_call.1} parent=5 // pred_fallthru
        _
    $region6: #{tpu_custom_call.1} parent=1 // loop_footer
      %s22 = sadd.s32 1, %s18
    $region7: #{tpu_custom_call.1} parent=1 // loop_footer_branch
      %17 = sbr.rel target = $region3
    $region8: #{tpu_custom_call.1} parent=1 // loop_exit
      _
    %550 = vsyncpa [#allocation6], 1
    %s551 = scalar_lea.sflag [#allocation6], 1
    %552 = vsyncpa %s551, 1
    %553 = vsyncpa [#allocation9], 1
    %s554 = scalar_lea.sflag [#allocation9], 1
    %555 = vsyncpa %s554, 1
    %556 = vsyncpa [#allocation7], 1
    %s557 = scalar_lea.sflag [#allocation7], 1
    %558 = vsyncpa %s557, 1

</llo_original>
